<compile_context>
chip_gen: v7x
topology: tpu7x:2x2x1
jax: 0.10.0
libtpu: 0.0.40
codegen_flags: <defaults>
</compile_context>

<pallas_src>
import jax
import jax.numpy as jnp
from jax import lax
from jax.experimental import pallas as pl
from jax.experimental.pallas import tpu as pltpu


def _round_up(v, m):
    return (v + m - 1) // m * m


def _conv_bn_relu(x, w, shift):
    """One fused layer on a (Cin, L) activation already resident in VMEM.

    x:     (Cin, L)        f32 activation
    w:     (Cout, 3*Cin)   conv weights, taps folded into K, BN scale folded in
    shift: (Cout, 1)       folded BN shift (includes conv bias)
    """
    cin, L = x.shape
    lane = lax.broadcasted_iota(jnp.int32, (cin, L), 1)
    # Replicate-padded neighbours, built in-register (XLU roll + VPU select):
    left = jnp.where(lane == 0, x, pltpu.roll(x, 1, 1))           # x[:, i-1]
    right = jnp.where(lane == L - 1, x, pltpu.roll(x, L - 1, 1))  # x[:, i+1]
    rhs = jnp.concatenate([left, x, right], axis=0)               # (3*Cin, L)
    acc = jnp.dot(w, rhs, preferred_element_type=jnp.float32)     # one MXU matmul
    return jnp.maximum(acc + shift, 0.0)


def _fused_kernel(x_ref, *refs):
    """x_ref: (1, C0p, L).  refs = [w1, s1, ..., w5, s5, out_ref]."""
    *param_refs, o_ref = refs
    x = x_ref[0]
    n_layers = len(param_refs) // 2
    for l in range(n_layers):
        w = param_refs[2 * l][...]        # (Coutp, 3*Cinp)
        sh = param_refs[2 * l + 1][...]   # (Coutp, 1)
        x = _conv_bn_relu(x, w, sh)
    o_ref[0] = x.astype(o_ref.dtype)


def n_vcnn_pallas(x_pad, packed_params):
    """x_pad: (N, C0p, L) with C0p a multiple of 8; returns (N, CoutP, L)."""
    N, C0p, L = x_pad.shape
    cout_p = packed_params[-1][1].shape[0]
    in_specs = [pl.BlockSpec((1, C0p, L), lambda n: (n, 0, 0))]
    args = [x_pad]
    for w, sh in packed_params:
        in_specs.append(pl.BlockSpec(w.shape, lambda n: (0, 0)))
        in_specs.append(pl.BlockSpec(sh.shape, lambda n: (0, 0)))
        args.append(w)
        args.append(sh)
    return pl.pallas_call(
        _fused_kernel,
        out_shape=jax.ShapeDtypeStruct((N, cout_p, L), x_pad.dtype),
        grid=(N,),
        in_specs=in_specs,
        out_specs=pl.BlockSpec((1, cout_p, L), lambda n: (n, 0, 0)),
        compiler_params=pltpu.CompilerParams(
            dimension_semantics=("parallel",)),
    )(*args)


@jax.jit
def n_vcnn_forward(x, packed_params):
    N, C, L = x.shape
    c0p = packed_params[0][0].shape[1] // 3
    if c0p != C:                       # pad input channels to a sublane multiple
        x = jnp.pad(x, ((0, 0), (0, c0p - C), (0, 0)))
    out_p = n_vcnn_pallas(x, packed_params)
    return out_p[:, :C, :]             # drop zero-padded output channels


def _init_params(key, num_channel):
    """Deterministic synthetic parameters matching N_VCNN_'s shapes.

    Returns (raw, packed):
      raw:    [(W (Cout,Cin,3), scale (Cout,), shift (Cout,)), ...]  for the reference
      packed: [(W' (CoutP, 3*CinP), shift' (CoutP, 1)), ...]          for the kernel
    """
    C = num_channel
    chan = [C, 16 * C, 8 * C, 4 * C, 2 * C, C]
    chan_p = [_round_up(c, 8) for c in chan]
    raw, packed = [], []
    eps = 1e-5
    for i in range(5):
        cin, cout = chan[i], chan[i + 1]
        cin_p, cout_p = chan_p[i], chan_p[i + 1]
        key, kw, kb, kg, kbt, km, kv = jax.random.split(key, 7)
        w = 0.1 * jax.random.normal(kw, (cout, cin, 3), jnp.float32)
        b = 0.05 * jax.random.normal(kb, (cout,), jnp.float32)
        if i < 4:  # conv1..conv4 are followed by a BatchNorm
            gamma = 1.0 + 0.1 * jax.random.normal(kg, (cout,), jnp.float32)
            beta = 0.05 * jax.random.normal(kbt, (cout,), jnp.float32)
            rmean = 0.05 * jax.random.normal(km, (cout,), jnp.float32)
            rvar = 1.0 + 0.2 * jnp.abs(jax.random.normal(kv, (cout,), jnp.float32))
            scale = gamma / jnp.sqrt(rvar + eps)
            shift = (b - rmean) * scale + beta
        else:      # conv5: no BN, just bias
            scale = jnp.ones((cout,), jnp.float32)
            shift = b
        raw.append((w, scale, shift))

        # Fold BN scale into W, fold the 3 taps into the contraction dim, and
        # zero-pad channels to sublane multiples of 8 (done once at init).
        w_scaled = scale[:, None, None] * w                       # (Cout, Cin, 3)
        w_packed = jnp.zeros((cout_p, 3 * cin_p), jnp.float32)
        for k in range(3):
            w_packed = w_packed.at[:cout, k * cin_p:k * cin_p + cin].set(
                w_scaled[:, :, k])
        shift_p = jnp.zeros((cout_p, 1), jnp.float32).at[:cout, 0].set(shift)
        packed.append((w_packed, shift_p))
    return raw, packed


def _reference_forward(x, raw_params):
    """Plain-JAX reference of the same math (correctness sanity check)."""
    for (w, scale, shift) in raw_params:
        xp = jnp.concatenate([x[:, :, :1], x, x[:, :, -1:]], axis=-1)
        y = lax.conv_general_dilated(
            xp, w, window_strides=(1,), padding="VALID",
            dimension_numbers=("NCH", "OIH", "NCH"),
        )
        y = y * scale[None, :, None] + shift[None, :, None]
        x = jnp.maximum(y, 0.0)
    return x


if __name__ == "__main__":
    num_channel = 4
    N, L = 2, 128
    key = jax.random.PRNGKey(0)
    key, kx = jax.random.split(key)
    x = jax.random.normal(kx, (N, num_channel, L), jnp.float32)
    raw_params, packed_params = _init_params(key, num_channel)

    out = n_vcnn_forward(x, packed_params)
    out = jax.block_until_ready(out)

    ref = _reference_forward(x, raw_params)
    assert out.shape == (N, num_channel, L)
    assert jnp.allclose(out, ref, atol=1e-4, rtol=1e-4), "mismatch vs reference"
    print("KERNEL_OK")
</pallas_src>

<mosaic_0001>
module attributes {stable_mosaic.version = 11 : i64} {
  func.func @_fused_kernel(%arg0: i32, %arg1: memref<1x8x128xf32, #tpu.memory_space<vmem>>, %arg2: memref<64x24xf32, #tpu.memory_space<vmem>>, %arg3: memref<64x1xf32, #tpu.memory_space<vmem>>, %arg4: memref<32x192xf32, #tpu.memory_space<vmem>>, %arg5: memref<32x1xf32, #tpu.memory_space<vmem>>, %arg6: memref<16x96xf32, #tpu.memory_space<vmem>>, %arg7: memref<16x1xf32, #tpu.memory_space<vmem>>, %arg8: memref<8x48xf32, #tpu.memory_space<vmem>>, %arg9: memref<8x1xf32, #tpu.memory_space<vmem>>, %arg10: memref<8x24xf32, #tpu.memory_space<vmem>>, %arg11: memref<8x1xf32, #tpu.memory_space<vmem>>, %arg12: memref<1x8x128xf32, #tpu.memory_space<vmem>>) attributes {dimension_semantics = [#tpu.dimension_semantics<parallel>], iteration_bounds = array<i64: 2>, scalar_prefetch = 0 : i64, scratch_operands = 0 : i64, tpu.core_type = #tpu.core_type<tc>, window_params = [{transform_indices = @transform_0, window_bounds = array<i64: 1, 8, 128>}, {pipeline_mode = #tpu.pipeline_mode<synchronous>, transform_indices = @transform_1, window_bounds = array<i64: 64, 24>}, {pipeline_mode = #tpu.pipeline_mode<synchronous>, transform_indices = @transform_2, window_bounds = array<i64: 64, 1>}, {pipeline_mode = #tpu.pipeline_mode<synchronous>, transform_indices = @transform_3, window_bounds = array<i64: 32, 192>}, {pipeline_mode = #tpu.pipeline_mode<synchronous>, transform_indices = @transform_4, window_bounds = array<i64: 32, 1>}, {pipeline_mode = #tpu.pipeline_mode<synchronous>, transform_indices = @transform_5, window_bounds = array<i64: 16, 96>}, {pipeline_mode = #tpu.pipeline_mode<synchronous>, transform_indices = @transform_6, window_bounds = array<i64: 16, 1>}, {pipeline_mode = #tpu.pipeline_mode<synchronous>, transform_indices = @transform_7, window_bounds = array<i64: 8, 48>}, {pipeline_mode = #tpu.pipeline_mode<synchronous>, transform_indices = @transform_8, window_bounds = array<i64: 8, 1>}, {pipeline_mode = #tpu.pipeline_mode<synchronous>, transform_indices = @transform_9, window_bounds = array<i64: 8, 24>}, {pipeline_mode = #tpu.pipeline_mode<synchronous>, transform_indices = @transform_10, window_bounds = array<i64: 8, 1>}, {transform_indices = @transform_11, window_bounds = array<i64: 1, 8, 128>}]} {
    %c0 = arith.constant 0 : index
    %c0_0 = arith.constant 0 : index
    %c0_1 = arith.constant 0 : index
    %0 = vector.load %arg1[%c0, %c0_0, %c0_1] : memref<1x8x128xf32, #tpu.memory_space<vmem>>, vector<1x8x128xf32>
    %1 = vector.shape_cast %0 : vector<1x8x128xf32> to vector<8x128xf32>
    %c0_2 = arith.constant 0 : index
    %c0_3 = arith.constant 0 : index
    %2 = vector.load %arg2[%c0_2, %c0_3] : memref<64x24xf32, #tpu.memory_space<vmem>>, vector<64x24xf32>
    %c0_4 = arith.constant 0 : index
    %c0_5 = arith.constant 0 : index
    %3 = vector.load %arg3[%c0_4, %c0_5] : memref<64x1xf32, #tpu.memory_space<vmem>>, vector<64x1xf32>
    %4 = tpu.iota {dimensions = array<i32: 1>} : vector<8x128xi32>
    %c0_i32 = arith.constant 0 : i32
    %5 = vector.broadcast %c0_i32 : i32 to vector<8x128xi32>
    %6 = arith.cmpi eq, %4, %5 : vector<8x128xi32>
    %c1_i32 = arith.constant 1 : i32
    %7 = tpu.dynamic_rotate %1 by %c1_i32 dim 1 : vector<8x128xf32>, i32 -> vector<8x128xf32>
    %8 = arith.select %6, %1, %7 : vector<8x128xi1>, vector<8x128xf32>
    %c127_i32 = arith.constant 127 : i32
    %9 = vector.broadcast %c127_i32 : i32 to vector<8x128xi32>
    %10 = arith.cmpi eq, %4, %9 : vector<8x128xi32>
    %c127_i32_6 = arith.constant 127 : i32
    %11 = tpu.dynamic_rotate %1 by %c127_i32_6 dim 1 : vector<8x128xf32>, i32 -> vector<8x128xf32>
    %12 = arith.select %10, %1, %11 : vector<8x128xi1>, vector<8x128xf32>
    %13 = tpu.concatenate %8, %1, %12 in 0 : vector<8x128xf32>, vector<8x128xf32>, vector<8x128xf32> -> vector<24x128xf32>
    %cst = arith.constant dense<0.000000e+00> : vector<64x128xf32>
    %14 = tpu.matmul %2, %13, %cst {dimension_numbers = #tpu.dot_dimension_numbers<[1], [0], [0], [1], [0, 0, 1, 1], [], []>} : vector<64x24xf32>, vector<24x128xf32>, vector<64x128xf32> -> vector<64x128xf32>
    %15 = vector.broadcast %3 : vector<64x1xf32> to vector<64x128xf32>
    %16 = arith.addf %14, %15 : vector<64x128xf32>
    %cst_7 = arith.constant 0.000000e+00 : f32
    %17 = vector.broadcast %cst_7 : f32 to vector<64x128xf32>
    %18 = arith.maximumf %16, %17 : vector<64x128xf32>
    %c0_8 = arith.constant 0 : index
    %c0_9 = arith.constant 0 : index
    %19 = vector.load %arg4[%c0_8, %c0_9] : memref<32x192xf32, #tpu.memory_space<vmem>>, vector<32x192xf32>
    %c0_10 = arith.constant 0 : index
    %c0_11 = arith.constant 0 : index
    %20 = vector.load %arg5[%c0_10, %c0_11] : memref<32x1xf32, #tpu.memory_space<vmem>>, vector<32x1xf32>
    %21 = tpu.iota {dimensions = array<i32: 1>} : vector<64x128xi32>
    %c0_i32_12 = arith.constant 0 : i32
    %22 = vector.broadcast %c0_i32_12 : i32 to vector<64x128xi32>
    %23 = arith.cmpi eq, %21, %22 : vector<64x128xi32>
    %c1_i32_13 = arith.constant 1 : i32
    %24 = tpu.dynamic_rotate %18 by %c1_i32_13 dim 1 : vector<64x128xf32>, i32 -> vector<64x128xf32>
    %25 = arith.select %23, %18, %24 : vector<64x128xi1>, vector<64x128xf32>
    %c127_i32_14 = arith.constant 127 : i32
    %26 = vector.broadcast %c127_i32_14 : i32 to vector<64x128xi32>
    %27 = arith.cmpi eq, %21, %26 : vector<64x128xi32>
    %c127_i32_15 = arith.constant 127 : i32
    %28 = tpu.dynamic_rotate %18 by %c127_i32_15 dim 1 : vector<64x128xf32>, i32 -> vector<64x128xf32>
    %29 = arith.select %27, %18, %28 : vector<64x128xi1>, vector<64x128xf32>
    %30 = tpu.concatenate %25, %18, %29 in 0 : vector<64x128xf32>, vector<64x128xf32>, vector<64x128xf32> -> vector<192x128xf32>
    %cst_16 = arith.constant dense<0.000000e+00> : vector<32x128xf32>
    %31 = tpu.matmul %19, %30, %cst_16 {dimension_numbers = #tpu.dot_dimension_numbers<[1], [0], [0], [1], [0, 0, 1, 1], [], []>} : vector<32x192xf32>, vector<192x128xf32>, vector<32x128xf32> -> vector<32x128xf32>
    %32 = vector.broadcast %20 : vector<32x1xf32> to vector<32x128xf32>
    %33 = arith.addf %31, %32 : vector<32x128xf32>
    %cst_17 = arith.constant 0.000000e+00 : f32
    %34 = vector.broadcast %cst_17 : f32 to vector<32x128xf32>
    %35 = arith.maximumf %33, %34 : vector<32x128xf32>
    %c0_18 = arith.constant 0 : index
    %c0_19 = arith.constant 0 : index
    %36 = vector.load %arg6[%c0_18, %c0_19] : memref<16x96xf32, #tpu.memory_space<vmem>>, vector<16x96xf32>
    %c0_20 = arith.constant 0 : index
    %c0_21 = arith.constant 0 : index
    %37 = vector.load %arg7[%c0_20, %c0_21] : memref<16x1xf32, #tpu.memory_space<vmem>>, vector<16x1xf32>
    %38 = tpu.iota {dimensions = array<i32: 1>} : vector<32x128xi32>
    %c0_i32_22 = arith.constant 0 : i32
    %39 = vector.broadcast %c0_i32_22 : i32 to vector<32x128xi32>
    %40 = arith.cmpi eq, %38, %39 : vector<32x128xi32>
    %c1_i32_23 = arith.constant 1 : i32
    %41 = tpu.dynamic_rotate %35 by %c1_i32_23 dim 1 : vector<32x128xf32>, i32 -> vector<32x128xf32>
    %42 = arith.select %40, %35, %41 : vector<32x128xi1>, vector<32x128xf32>
    %c127_i32_24 = arith.constant 127 : i32
    %43 = vector.broadcast %c127_i32_24 : i32 to vector<32x128xi32>
    %44 = arith.cmpi eq, %38, %43 : vector<32x128xi32>
    %c127_i32_25 = arith.constant 127 : i32
    %45 = tpu.dynamic_rotate %35 by %c127_i32_25 dim 1 : vector<32x128xf32>, i32 -> vector<32x128xf32>
    %46 = arith.select %44, %35, %45 : vector<32x128xi1>, vector<32x128xf32>
    %47 = tpu.concatenate %42, %35, %46 in 0 : vector<32x128xf32>, vector<32x128xf32>, vector<32x128xf32> -> vector<96x128xf32>
    %cst_26 = arith.constant dense<0.000000e+00> : vector<16x128xf32>
    %48 = tpu.matmul %36, %47, %cst_26 {dimension_numbers = #tpu.dot_dimension_numbers<[1], [0], [0], [1], [0, 0, 1, 1], [], []>} : vector<16x96xf32>, vector<96x128xf32>, vector<16x128xf32> -> vector<16x128xf32>
    %49 = vector.broadcast %37 : vector<16x1xf32> to vector<16x128xf32>
    %50 = arith.addf %48, %49 : vector<16x128xf32>
    %cst_27 = arith.constant 0.000000e+00 : f32
    %51 = vector.broadcast %cst_27 : f32 to vector<16x128xf32>
    %52 = arith.maximumf %50, %51 : vector<16x128xf32>
    %c0_28 = arith.constant 0 : index
    %c0_29 = arith.constant 0 : index
    %53 = vector.load %arg8[%c0_28, %c0_29] : memref<8x48xf32, #tpu.memory_space<vmem>>, vector<8x48xf32>
    %c0_30 = arith.constant 0 : index
    %c0_31 = arith.constant 0 : index
    %54 = vector.load %arg9[%c0_30, %c0_31] : memref<8x1xf32, #tpu.memory_space<vmem>>, vector<8x1xf32>
    %55 = tpu.iota {dimensions = array<i32: 1>} : vector<16x128xi32>
    %c0_i32_32 = arith.constant 0 : i32
    %56 = vector.broadcast %c0_i32_32 : i32 to vector<16x128xi32>
    %57 = arith.cmpi eq, %55, %56 : vector<16x128xi32>
    %c1_i32_33 = arith.constant 1 : i32
    %58 = tpu.dynamic_rotate %52 by %c1_i32_33 dim 1 : vector<16x128xf32>, i32 -> vector<16x128xf32>
    %59 = arith.select %57, %52, %58 : vector<16x128xi1>, vector<16x128xf32>
    %c127_i32_34 = arith.constant 127 : i32
    %60 = vector.broadcast %c127_i32_34 : i32 to vector<16x128xi32>
    %61 = arith.cmpi eq, %55, %60 : vector<16x128xi32>
    %c127_i32_35 = arith.constant 127 : i32
    %62 = tpu.dynamic_rotate %52 by %c127_i32_35 dim 1 : vector<16x128xf32>, i32 -> vector<16x128xf32>
    %63 = arith.select %61, %52, %62 : vector<16x128xi1>, vector<16x128xf32>
    %64 = tpu.concatenate %59, %52, %63 in 0 : vector<16x128xf32>, vector<16x128xf32>, vector<16x128xf32> -> vector<48x128xf32>
    %cst_36 = arith.constant dense<0.000000e+00> : vector<8x128xf32>
    %65 = tpu.matmul %53, %64, %cst_36 {dimension_numbers = #tpu.dot_dimension_numbers<[1], [0], [0], [1], [0, 0, 1, 1], [], []>} : vector<8x48xf32>, vector<48x128xf32>, vector<8x128xf32> -> vector<8x128xf32>
    %66 = vector.broadcast %54 : vector<8x1xf32> to vector<8x128xf32>
    %67 = arith.addf %65, %66 : vector<8x128xf32>
    %cst_37 = arith.constant 0.000000e+00 : f32
    %68 = vector.broadcast %cst_37 : f32 to vector<8x128xf32>
    %69 = arith.maximumf %67, %68 : vector<8x128xf32>
    %c0_38 = arith.constant 0 : index
    %c0_39 = arith.constant 0 : index
    %70 = vector.load %arg10[%c0_38, %c0_39] : memref<8x24xf32, #tpu.memory_space<vmem>>, vector<8x24xf32>
    %c0_40 = arith.constant 0 : index
    %c0_41 = arith.constant 0 : index
    %71 = vector.load %arg11[%c0_40, %c0_41] : memref<8x1xf32, #tpu.memory_space<vmem>>, vector<8x1xf32>
    %72 = tpu.iota {dimensions = array<i32: 1>} : vector<8x128xi32>
    %c0_i32_42 = arith.constant 0 : i32
    %73 = vector.broadcast %c0_i32_42 : i32 to vector<8x128xi32>
    %74 = arith.cmpi eq, %72, %73 : vector<8x128xi32>
    %c1_i32_43 = arith.constant 1 : i32
    %75 = tpu.dynamic_rotate %69 by %c1_i32_43 dim 1 : vector<8x128xf32>, i32 -> vector<8x128xf32>
    %76 = arith.select %74, %69, %75 : vector<8x128xi1>, vector<8x128xf32>
    %c127_i32_44 = arith.constant 127 : i32
    %77 = vector.broadcast %c127_i32_44 : i32 to vector<8x128xi32>
    %78 = arith.cmpi eq, %72, %77 : vector<8x128xi32>
    %c127_i32_45 = arith.constant 127 : i32
    %79 = tpu.dynamic_rotate %69 by %c127_i32_45 dim 1 : vector<8x128xf32>, i32 -> vector<8x128xf32>
    %80 = arith.select %78, %69, %79 : vector<8x128xi1>, vector<8x128xf32>
    %81 = tpu.concatenate %76, %69, %80 in 0 : vector<8x128xf32>, vector<8x128xf32>, vector<8x128xf32> -> vector<24x128xf32>
    %cst_46 = arith.constant dense<0.000000e+00> : vector<8x128xf32>
    %82 = tpu.matmul %70, %81, %cst_46 {dimension_numbers = #tpu.dot_dimension_numbers<[1], [0], [0], [1], [0, 0, 1, 1], [], []>} : vector<8x24xf32>, vector<24x128xf32>, vector<8x128xf32> -> vector<8x128xf32>
    %83 = vector.broadcast %71 : vector<8x1xf32> to vector<8x128xf32>
    %84 = arith.addf %82, %83 : vector<8x128xf32>
    %cst_47 = arith.constant 0.000000e+00 : f32
    %85 = vector.broadcast %cst_47 : f32 to vector<8x128xf32>
    %86 = arith.maximumf %84, %85 : vector<8x128xf32>
    %c0_48 = arith.constant 0 : index
    %c0_49 = arith.constant 0 : index
    %c0_50 = arith.constant 0 : index
    %87 = vector.load %arg12[%c0_48, %c0_49, %c0_50] : memref<1x8x128xf32, #tpu.memory_space<vmem>>, vector<1x8x128xf32>
    %88 = vector.shape_cast %87 : vector<1x8x128xf32> to vector<8x128xf32>
    %89 = vector.shape_cast %86 : vector<8x128xf32> to vector<1x8x128xf32>
    tpu.vector_store %arg12[%c0_48, %c0_49, %c0_50], %89 {strides = array<i32>} : memref<1x8x128xf32, #tpu.memory_space<vmem>>, vector<1x8x128xf32>,
    return
  }
  func.func @transform_0(%arg0: i32) -> (i32, i32, i32) {
    %c0_i32 = arith.constant 0 : i32
    %c0_i32_0 = arith.constant 0 : i32
    %c0_i32_1 = arith.constant 0 : i32
    return %arg0, %c0_i32, %c0_i32_0 : i32, i32, i32
  }
  func.func @transform_1(%arg0: i32) -> (i32, i32) {
    %c0_i32 = arith.constant 0 : i32
    %c0_i32_0 = arith.constant 0 : i32
    %c0_i32_1 = arith.constant 0 : i32
    return %c0_i32, %c0_i32_0 : i32, i32
  }
  func.func @transform_2(%arg0: i32) -> (i32, i32) {
    %c0_i32 = arith.constant 0 : i32
    %c0_i32_0 = arith.constant 0 : i32
    %c0_i32_1 = arith.constant 0 : i32
    return %c0_i32, %c0_i32_0 : i32, i32
  }
  func.func @transform_3(%arg0: i32) -> (i32, i32) {
    %c0_i32 = arith.constant 0 : i32
    %c0_i32_0 = arith.constant 0 : i32
    %c0_i32_1 = arith.constant 0 : i32
    return %c0_i32, %c0_i32_0 : i32, i32
  }
  func.func @transform_4(%arg0: i32) -> (i32, i32) {
    %c0_i32 = arith.constant 0 : i32
    %c0_i32_0 = arith.constant 0 : i32
    %c0_i32_1 = arith.constant 0 : i32
    return %c0_i32, %c0_i32_0 : i32, i32
  }
  func.func @transform_5(%arg0: i32) -> (i32, i32) {
    %c0_i32 = arith.constant 0 : i32
    %c0_i32_0 = arith.constant 0 : i32
    %c0_i32_1 = arith.constant 0 : i32
    return %c0_i32, %c0_i32_0 : i32, i32
  }
  func.func @transform_6(%arg0: i32) -> (i32, i32) {
    %c0_i32 = arith.constant 0 : i32
    %c0_i32_0 = arith.constant 0 : i32
    %c0_i32_1 = arith.constant 0 : i32
    return %c0_i32, %c0_i32_0 : i32, i32
  }
  func.func @transform_7(%arg0: i32) -> (i32, i32) {
    %c0_i32 = arith.constant 0 : i32
    %c0_i32_0 = arith.constant 0 : i32
    %c0_i32_1 = arith.constant 0 : i32
    return %c0_i32, %c0_i32_0 : i32, i32
  }
  func.func @transform_8(%arg0: i32) -> (i32, i32) {
    %c0_i32 = arith.constant 0 : i32
    %c0_i32_0 = arith.constant 0 : i32
    %c0_i32_1 = arith.constant 0 : i32
    return %c0_i32, %c0_i32_0 : i32, i32
  }
  func.func @transform_9(%arg0: i32) -> (i32, i32) {
    %c0_i32 = arith.constant 0 : i32
    %c0_i32_0 = arith.constant 0 : i32
    %c0_i32_1 = arith.constant 0 : i32
    return %c0_i32, %c0_i32_0 : i32, i32
  }
  func.func @transform_10(%arg0: i32) -> (i32, i32) {
    %c0_i32 = arith.constant 0 : i32
    %c0_i32_0 = arith.constant 0 : i32
    %c0_i32_1 = arith.constant 0 : i32
    return %c0_i32, %c0_i32_0 : i32, i32
  }
  func.func @transform_11(%arg0: i32) -> (i32, i32, i32) {
    %c0_i32 = arith.constant 0 : i32
    %c0_i32_0 = arith.constant 0 : i32
    %c0_i32_1 = arith.constant 0 : i32
    return %arg0, %c0_i32, %c0_i32_0 : i32, i32, i32
  }
}

</mosaic_0001>

<llo_original>
// kernel: n_vcnn_forward.1
$region0: #{n_vcnn_forward.1}
  #allocation0 [shape = 'u32[]', space=smem, size = 0x4, offset = 0x4, fixed_abs, tag = 'smem constant byte address 0x4 - core index']
  #allocation1 [shape = 'u32[144,128]{1,0:T(1,128)}', space=vmem, size = 0x12000, scoped, tag = 'internal scratch']
  %s0 = inlined_call_operand.vmem [shape: f32[2,8,128], index: 0, kind: input, shape index: {}]
  %s1 = inlined_call_operand.vmem [shape: f32[64,24], index: 1, kind: input, shape index: {}]
  %s2 = inlined_call_operand.vmem [shape: f32[64,1], index: 2, kind: input, shape index: {}]
  %s3 = inlined_call_operand.vmem [shape: f32[32,192], index: 3, kind: input, shape index: {}]
  %s4 = inlined_call_operand.vmem [shape: f32[32,1], index: 4, kind: input, shape index: {}]
  %s5 = inlined_call_operand.vmem [shape: f32[16,96], index: 5, kind: input, shape index: {}]
  %s6 = inlined_call_operand.vmem [shape: f32[16,1], index: 6, kind: input, shape index: {}]
  %s7 = inlined_call_operand.vmem [shape: f32[8,48], index: 7, kind: input, shape index: {}]
  %s8 = inlined_call_operand.vmem [shape: f32[8,1], index: 8, kind: input, shape index: {}]
  %s9 = inlined_call_operand.vmem [shape: f32[8,24], index: 9, kind: input, shape index: {}]
  %s10 = inlined_call_operand.vmem [shape: f32[8,1], index: 10, kind: input, shape index: {}]
  %s11 = inlined_call_operand.vmem [shape: f32[2,8,128], index: 11, kind: output, shape index: {}]
  %s12 = sld [smem:[#allocation0]]
  $region77: #{n_vcnn_forward.1} parent=0
    _
  %s14 = ssub.s32 1, %s12
  %s15 = scalar_select 0, %s14, %s12
  loop: start=0, step=1, limit=4
  $region2: #{n_vcnn_forward.1} parent=0 // loop_pre_header
    _
  $region3: #{n_vcnn_forward.1} parent=0 // loop_header
    %s17 = sphi 0, %s21
    %p18 = scmp.ge.s32.totalorder %s17, 4
    %s27 = sphi 0, %s29
    %s30 = sphi 0, %s27
    %s31 = sphi 0, %s30
    %s47 = sphi 0, %s31
    %s51 = sphi 0, %s51
    %s53 = sphi 0, %s51
    %s54 = sphi 0, %s53
    %s68 = sphi 0, %s54
    %s72 = sphi 0, %s72
    %s74 = sphi 0, %s72
    %s75 = sphi 0, %s74
    %s89 = sphi 0, %s75
    %s93 = sphi 0, %s93
    %s95 = sphi 0, %s93
    %s96 = sphi 0, %s95
    %s110 = sphi 0, %s96
    %s114 = sphi 0, %s114
    %s116 = sphi 0, %s114
    %s117 = sphi 0, %s116
    %s131 = sphi 0, %s117
    %s135 = sphi 0, %s135
    %s137 = sphi 0, %s135
    %s138 = sphi 0, %s137
    %s152 = sphi 0, %s138
    %s156 = sphi 0, %s156
    %s158 = sphi 0, %s156
    %s159 = sphi 0, %s158
    %s173 = sphi 0, %s159
    %s177 = sphi 0, %s177
    %s179 = sphi 0, %s177
    %s180 = sphi 0, %s179
    %s194 = sphi 0, %s180
    %s198 = sphi 0, %s198
    %s200 = sphi 0, %s198
    %s201 = sphi 0, %s200
    %s215 = sphi 0, %s201
    %s219 = sphi 0, %s219
    %s221 = sphi 0, %s219
    %s222 = sphi 0, %s221
    %s236 = sphi 0, %s222
    %s240 = sphi 0, %s240
    %s242 = sphi 0, %s240
    %s243 = sphi 0, %s242
    %s257 = sphi 0, %s243
    %s263 = sphi 0, %s265
    %s266 = sphi 0, %s263
    %s267 = sphi 0, %s266
    %s283 = sphi 0, %s267
  $region4: #{n_vcnn_forward.1} parent=0 // loop_header_branch
    %20 = sbr.rel (%p18) target = $region8
  $region5: #{n_vcnn_forward.1} parent=0 // loop_body
    %s22 = ssub.s32 %s17, 1
    %s23 = ssub.s32 %s17, 2
    %s24 = sadd.s32 %s17, 1
    %s25 = ssub.s32 %s17, %s24
    %p26 = scmp.eq.s32.totalorder %s25, 0
    %s28 = sadd.s32 %s27, 1
    %s29 = scalar_select %p26, %s27, %s28
    %p32 = pneg %p26
    %p33 = scmp.eq.s32.totalorder %s17, 1
    %p34 = por %p32, %p33
    %p35 = scmp.ne.s32.totalorder %s27, %s30
    %p36 = scmp.eq.s32.totalorder %s17, 0
    %p37 = por %p35, %p36
    %p38 = scmp.ne.s32.totalorder %s27, %s30
    %p39 = scmp.eq.s32.totalorder %s22, 1
    %p40 = por %p38, %p39
    %p41 = scmp.ne.s32.totalorder %s30, %s31
    %p42 = scmp.eq.s32.totalorder %s22, 0
    %p43 = por %p41, %p42
    %p44 = scmp.ne.s32.totalorder %s30, %s31
    %p45 = scmp.eq.s32.totalorder %s23, 1
    %p46 = por %p44, %p45
    %p48 = scmp.ne.s32.totalorder %s31, %s47
    %p49 = scmp.eq.s32.totalorder %s23, 0
    %p50 = por %p48, %p49
    %s52 = sadd.s32 %s51, 1
    %p55 = scmp.eq.s32.totalorder %s17, 1
    %p56 = scmp.ne.s32.totalorder %s51, %s53
    %p57 = scmp.eq.s32.totalorder %s17, 0
    %p58 = por %p56, %p57
    %p59 = scmp.ne.s32.totalorder %s51, %s53
    %p60 = scmp.eq.s32.totalorder %s22, 1
    %p61 = por %p59, %p60
    %p62 = scmp.ne.s32.totalorder %s53, %s54
    %p63 = scmp.eq.s32.totalorder %s22, 0
    %p64 = por %p62, %p63
    %p65 = scmp.ne.s32.totalorder %s53, %s54
    %p66 = scmp.eq.s32.totalorder %s23, 1
    %p67 = por %p65, %p66
    %p69 = scmp.ne.s32.totalorder %s54, %s68
    %p70 = scmp.eq.s32.totalorder %s23, 0
    %p71 = por %p69, %p70
    %s73 = sadd.s32 %s72, 1
    %p76 = scmp.eq.s32.totalorder %s17, 1
    %p77 = scmp.ne.s32.totalorder %s72, %s74
    %p78 = scmp.eq.s32.totalorder %s17, 0
    %p79 = por %p77, %p78
    %p80 = scmp.ne.s32.totalorder %s72, %s74
    %p81 = scmp.eq.s32.totalorder %s22, 1
    %p82 = por %p80, %p81
    %p83 = scmp.ne.s32.totalorder %s74, %s75
    %p84 = scmp.eq.s32.totalorder %s22, 0
    %p85 = por %p83, %p84
    %p86 = scmp.ne.s32.totalorder %s74, %s75
    %p87 = scmp.eq.s32.totalorder %s23, 1
    %p88 = por %p86, %p87
    %p90 = scmp.ne.s32.totalorder %s75, %s89
    %p91 = scmp.eq.s32.totalorder %s23, 0
    %p92 = por %p90, %p91
    %s94 = sadd.s32 %s93, 1
    %p97 = scmp.eq.s32.totalorder %s17, 1
    %p98 = scmp.ne.s32.totalorder %s93, %s95
    %p99 = scmp.eq.s32.totalorder %s17, 0
    %p100 = por %p98, %p99
    %p101 = scmp.ne.s32.totalorder %s93, %s95
    %p102 = scmp.eq.s32.totalorder %s22, 1
    %p103 = por %p101, %p102
    %p104 = scmp.ne.s32.totalorder %s95, %s96
    %p105 = scmp.eq.s32.totalorder %s22, 0
    %p106 = por %p104, %p105
    %p107 = scmp.ne.s32.totalorder %s95, %s96
    %p108 = scmp.eq.s32.totalorder %s23, 1
    %p109 = por %p107, %p108
    %p111 = scmp.ne.s32.totalorder %s96, %s110
    %p112 = scmp.eq.s32.totalorder %s23, 0
    %p113 = por %p111, %p112
    %s115 = sadd.s32 %s114, 1
    %p118 = scmp.eq.s32.totalorder %s17, 1
    %p119 = scmp.ne.s32.totalorder %s114, %s116
    %p120 = scmp.eq.s32.totalorder %s17, 0
    %p121 = por %p119, %p120
    %p122 = scmp.ne.s32.totalorder %s114, %s116
    %p123 = scmp.eq.s32.totalorder %s22, 1
    %p124 = por %p122, %p123
    %p125 = scmp.ne.s32.totalorder %s116, %s117
    %p126 = scmp.eq.s32.totalorder %s22, 0
    %p127 = por %p125, %p126
    %p128 = scmp.ne.s32.totalorder %s116, %s117
    %p129 = scmp.eq.s32.totalorder %s23, 1
    %p130 = por %p128, %p129
    %p132 = scmp.ne.s32.totalorder %s117, %s131
    %p133 = scmp.eq.s32.totalorder %s23, 0
    %p134 = por %p132, %p133
    %s136 = sadd.s32 %s135, 1
    %p139 = scmp.eq.s32.totalorder %s17, 1
    %p140 = scmp.ne.s32.totalorder %s135, %s137
    %p141 = scmp.eq.s32.totalorder %s17, 0
    %p142 = por %p140, %p141
    %p143 = scmp.ne.s32.totalorder %s135, %s137
    %p144 = scmp.eq.s32.totalorder %s22, 1
    %p145 = por %p143, %p144
    %p146 = scmp.ne.s32.totalorder %s137, %s138
    %p147 = scmp.eq.s32.totalorder %s22, 0
    %p148 = por %p146, %p147
    %p149 = scmp.ne.s32.totalorder %s137, %s138
    %p150 = scmp.eq.s32.totalorder %s23, 1
    %p151 = por %p149, %p150
    %p153 = scmp.ne.s32.totalorder %s138, %s152
    %p154 = scmp.eq.s32.totalorder %s23, 0
    %p155 = por %p153, %p154
    %s157 = sadd.s32 %s156, 1
    %p160 = scmp.eq.s32.totalorder %s17, 1
    %p161 = scmp.ne.s32.totalorder %s156, %s158
    %p162 = scmp.eq.s32.totalorder %s17, 0
    %p163 = por %p161, %p162
    %p164 = scmp.ne.s32.totalorder %s156, %s158
    %p165 = scmp.eq.s32.totalorder %s22, 1
    %p166 = por %p164, %p165
    %p167 = scmp.ne.s32.totalorder %s158, %s159
    %p168 = scmp.eq.s32.totalorder %s22, 0
    %p169 = por %p167, %p168
    %p170 = scmp.ne.s32.totalorder %s158, %s159
    %p171 = scmp.eq.s32.totalorder %s23, 1
    %p172 = por %p170, %p171
    %p174 = scmp.ne.s32.totalorder %s159, %s173
    %p175 = scmp.eq.s32.totalorder %s23, 0
    %p176 = por %p174, %p175
    %s178 = sadd.s32 %s177, 1
    %p181 = scmp.eq.s32.totalorder %s17, 1
    %p182 = scmp.ne.s32.totalorder %s177, %s179
    %p183 = scmp.eq.s32.totalorder %s17, 0
    %p184 = por %p182, %p183
    %p185 = scmp.ne.s32.totalorder %s177, %s179
    %p186 = scmp.eq.s32.totalorder %s22, 1
    %p187 = por %p185, %p186
    %p188 = scmp.ne.s32.totalorder %s179, %s180
    %p189 = scmp.eq.s32.totalorder %s22, 0
    %p190 = por %p188, %p189
    %p191 = scmp.ne.s32.totalorder %s179, %s180
    %p192 = scmp.eq.s32.totalorder %s23, 1
    %p193 = por %p191, %p192
    %p195 = scmp.ne.s32.totalorder %s180, %s194
    %p196 = scmp.eq.s32.totalorder %s23, 0
    %p197 = por %p195, %p196
    %s199 = sadd.s32 %s198, 1
    %p202 = scmp.eq.s32.totalorder %s17, 1
    %p203 = scmp.ne.s32.totalorder %s198, %s200
    %p204 = scmp.eq.s32.totalorder %s17, 0
    %p205 = por %p203, %p204
    %p206 = scmp.ne.s32.totalorder %s198, %s200
    %p207 = scmp.eq.s32.totalorder %s22, 1
    %p208 = por %p206, %p207
    %p209 = scmp.ne.s32.totalorder %s200, %s201
    %p210 = scmp.eq.s32.totalorder %s22, 0
    %p211 = por %p209, %p210
    %p212 = scmp.ne.s32.totalorder %s200, %s201
    %p213 = scmp.eq.s32.totalorder %s23, 1
    %p214 = por %p212, %p213
    %p216 = scmp.ne.s32.totalorder %s201, %s215
    %p217 = scmp.eq.s32.totalorder %s23, 0
    %p218 = por %p216, %p217
    %s220 = sadd.s32 %s219, 1
    %p223 = scmp.eq.s32.totalorder %s17, 1
    %p224 = scmp.ne.s32.totalorder %s219, %s221
    %p225 = scmp.eq.s32.totalorder %s17, 0
    %p226 = por %p224, %p225
    %p227 = scmp.ne.s32.totalorder %s219, %s221
    %p228 = scmp.eq.s32.totalorder %s22, 1
    %p229 = por %p227, %p228
    %p230 = scmp.ne.s32.totalorder %s221, %s222
    %p231 = scmp.eq.s32.totalorder %s22, 0
    %p232 = por %p230, %p231
    %p233 = scmp.ne.s32.totalorder %s221, %s222
    %p234 = scmp.eq.s32.totalorder %s23, 1
    %p235 = por %p233, %p234
    %p237 = scmp.ne.s32.totalorder %s222, %s236
    %p238 = scmp.eq.s32.totalorder %s23, 0
    %p239 = por %p237, %p238
    %s241 = sadd.s32 %s240, 1
    %p244 = scmp.eq.s32.totalorder %s17, 1
    %p245 = scmp.ne.s32.totalorder %s240, %s242
    %p246 = scmp.eq.s32.totalorder %s17, 0
    %p247 = por %p245, %p246
    %p248 = scmp.ne.s32.totalorder %s240, %s242
    %p249 = scmp.eq.s32.totalorder %s22, 1
    %p250 = por %p248, %p249
    %p251 = scmp.ne.s32.totalorder %s242, %s243
    %p252 = scmp.eq.s32.totalorder %s22, 0
    %p253 = por %p251, %p252
    %p254 = scmp.ne.s32.totalorder %s242, %s243
    %p255 = scmp.eq.s32.totalorder %s23, 1
    %p256 = por %p254, %p255
    %p258 = scmp.ne.s32.totalorder %s243, %s257
    %p259 = scmp.eq.s32.totalorder %s23, 0
    %p260 = por %p258, %p259
    %s261 = ssub.s32 %s17, %s24
    %p262 = scmp.eq.s32.totalorder %s261, 0
    %s264 = sadd.s32 %s263, 1
    %s265 = scalar_select %p262, %s263, %s264
    %p268 = pneg %p262
    %p269 = scmp.eq.s32.totalorder %s17, 1
    %p270 = por %p268, %p269
    %p271 = scmp.ne.s32.totalorder %s263, %s266
    %p272 = scmp.eq.s32.totalorder %s17, 0
    %p273 = por %p271, %p272
    %p274 = scmp.ne.s32.totalorder %s263, %s266
    %p275 = scmp.eq.s32.totalorder %s22, 1
    %p276 = por %p274, %p275
    %p277 = scmp.ne.s32.totalorder %s266, %s267
    %p278 = scmp.eq.s32.totalorder %s22, 0
    %p279 = por %p277, %p278
    %p280 = scmp.ne.s32.totalorder %s266, %s267
    %p281 = scmp.eq.s32.totalorder %s23, 1
    %p282 = por %p280, %p281
    %p284 = scmp.ne.s32.totalorder %s267, %s283
    %p285 = scmp.eq.s32.totalorder %s23, 0
    %p286 = por %p284, %p285
    %p287 = scmp.le.s32.totalorder 1, %s17
    %p288 = scmp.lt.s32.totalorder %s17, 3
    %p289 = pnand %p287, %p288
    %p290 = pneg %p289
    // Predicated region
    $region9: #{n_vcnn_forward.1} parent=5 // pred_check
      _
    $region10: #{n_vcnn_forward.1} parent=5 // pred_check_branch
      %292 = sbr.rel (%p289) target = $region12
    $region11: #{n_vcnn_forward.1} parent=5 // pred_region
      %s293 = ssub.s32 %s17, 1
      // Predicated region
      $region13: #{n_vcnn_forward.1} parent=11 // pred_check
        %p294 = pneg %p64
      $region14: #{n_vcnn_forward.1} parent=11 // pred_check_branch
        %296 = sbr.rel (%p294) target = $region16
      $region15: #{n_vcnn_forward.1} parent=11 // pred_region
        _
      $region16: #{n_vcnn_forward.1} parent=11 // pred_fallthru
        _
      // Predicated region
      $region17: #{n_vcnn_forward.1} parent=11 // pred_check
        %p297 = pneg %p85
      $region18: #{n_vcnn_forward.1} parent=11 // pred_check_branch
        %299 = sbr.rel (%p297) target = $region20
      $region19: #{n_vcnn_forward.1} parent=11 // pred_region
        _
      $region20: #{n_vcnn_forward.1} parent=11 // pred_fallthru
        _
      // Predicated region
      $region21: #{n_vcnn_forward.1} parent=11 // pred_check
        %p300 = pneg %p106
      $region22: #{n_vcnn_forward.1} parent=11 // pred_check_branch
        %302 = sbr.rel (%p300) target = $region24
      $region23: #{n_vcnn_forward.1} parent=11 // pred_region
        _
      $region24: #{n_vcnn_forward.1} parent=11 // pred_fallthru
        _
      // Predicated region
      $region25: #{n_vcnn_forward.1} parent=11 // pred_check
        %p303 = pneg %p127
      $region26: #{n_vcnn_forward.1} parent=11 // pred_check_branch
        %305 = sbr.rel (%p303) target = $region28
      $region27: #{n_vcnn_forward.1} parent=11 // pred_region
        _
      $region28: #{n_vcnn_forward.1} parent=11 // pred_fallthru
        _
      // Predicated region
      $region29: #{n_vcnn_forward.1} parent=11 // pred_check
        %p306 = pneg %p148
      $region30: #{n_vcnn_forward.1} parent=11 // pred_check_branch
        %308 = sbr.rel (%p306) target = $region32
      $region31: #{n_vcnn_forward.1} parent=11 // pred_region
        _
      $region32: #{n_vcnn_forward.1} parent=11 // pred_fallthru
        _
      // Predicated region
      $region33: #{n_vcnn_forward.1} parent=11 // pred_check
        %p309 = pneg %p169
      $region34: #{n_vcnn_forward.1} parent=11 // pred_check_branch
        %311 = sbr.rel (%p309) target = $region36
      $region35: #{n_vcnn_forward.1} parent=11 // pred_region
        _
      $region36: #{n_vcnn_forward.1} parent=11 // pred_fallthru
        _
      // Predicated region
      $region37: #{n_vcnn_forward.1} parent=11 // pred_check
        %p312 = pneg %p190
      $region38: #{n_vcnn_forward.1} parent=11 // pred_check_branch
        %314 = sbr.rel (%p312) target = $region40
      $region39: #{n_vcnn_forward.1} parent=11 // pred_region
        _
      $region40: #{n_vcnn_forward.1} parent=11 // pred_fallthru
        _
      // Predicated region
      $region41: #{n_vcnn_forward.1} parent=11 // pred_check
        %p315 = pneg %p211
      $region42: #{n_vcnn_forward.1} parent=11 // pred_check_branch
        %317 = sbr.rel (%p315) target = $region44
      $region43: #{n_vcnn_forward.1} parent=11 // pred_region
        _
      $region44: #{n_vcnn_forward.1} parent=11 // pred_fallthru
        _
      // Predicated region
      $region45: #{n_vcnn_forward.1} parent=11 // pred_check
        %p318 = pneg %p232
      $region46: #{n_vcnn_forward.1} parent=11 // pred_check_branch
        %320 = sbr.rel (%p318) target = $region48
      $region47: #{n_vcnn_forward.1} parent=11 // pred_region
        _
      $region48: #{n_vcnn_forward.1} parent=11 // pred_fallthru
        _
      // Predicated region
      $region49: #{n_vcnn_forward.1} parent=11 // pred_check
        %p321 = pneg %p253
      $region50: #{n_vcnn_forward.1} parent=11 // pred_check_branch
        %323 = sbr.rel (%p321) target = $region52
      $region51: #{n_vcnn_forward.1} parent=11 // pred_region
        _
      $region52: #{n_vcnn_forward.1} parent=11 // pred_fallthru
        _
    $region12: #{n_vcnn_forward.1} parent=5 // pred_fallthru
      _
    %p324 = scmp.lt.s32.totalorder %s17, 2
    // Predicated region
    $region53: #{n_vcnn_forward.1} parent=5 // pred_check
      %p325 = pneg %p324
    $region54: #{n_vcnn_forward.1} parent=5 // pred_check_branch
      %327 = sbr.rel (%p325) target = $region56
    $region55: #{n_vcnn_forward.1} parent=5 // pred_region
      // Predicated region
      $region57: #{n_vcnn_forward.1} parent=55 // pred_check
        %p328 = pneg %p37
      $region58: #{n_vcnn_forward.1} parent=55 // pred_check_branch
        %330 = sbr.rel (%p328) target = $region60
      $region59: #{n_vcnn_forward.1} parent=55 // pred_region
        %p331 = scmp.lt.s32.totalorder %s17, 1
        %s332 = scalar_select %p331, %s17, 1
        %s333 = smul.addr %s332, 8
        %s334 = scalar_lea.vmem %s0, %s333
      $region60: #{n_vcnn_forward.1} parent=55 // pred_fallthru
        _
    $region56: #{n_vcnn_forward.1} parent=5 // pred_fallthru
      _
    %p335 = scmp.le.s32.totalorder 1, %s17
    %p336 = scmp.lt.s32.totalorder %s17, 3
    %p337 = pnand %p335, %p336
    %p338 = pneg %p337
    // Predicated region
    $region61: #{n_vcnn_forward.1} parent=5 // pred_check
      _
    $region62: #{n_vcnn_forward.1} parent=5 // pred_check_branch
      %340 = sbr.rel (%p337) target = $region64
    $region63: #{n_vcnn_forward.1} parent=5 // pred_region
      %s341 = ssub.s32 %s17, 1
      %p342 = scmp.lt.s32.totalorder %s22, 1
      %s343 = scalar_select %p342, %s22, 1
      %s344 = smul.addr %s343, 8
      %s345 = scalar_lea.vmem %s0, %s344
      %p346 = pneg %p43
      %p347 = pneg %p40
      %p348 = pneg %p64
      %p349 = pneg %p61
      %p350 = pneg %p85
      %p351 = pneg %p82
      %p352 = pneg %p106
      %p353 = pneg %p103
      %p354 = pneg %p127
      %p355 = pneg %p124
      %p356 = pneg %p148
      %p357 = pneg %p145
      %p358 = pneg %p169
      %p359 = pneg %p166
      %p360 = pneg %p190
      %p361 = pneg %p187
      %p362 = pneg %p211
      %p363 = pneg %p208
      %p364 = pneg %p232
      %p365 = pneg %p229
      %p366 = pneg %p253
      %p367 = pneg %p250
      %p368 = pneg %p279
      %p369 = pneg %p276
      %p370 = scmp.lt.s32.totalorder %s22, 1
      %s371 = scalar_select %p370, %s22, 1
      %s372 = smul.addr %s371, 8
      %s373 = scalar_lea.vmem %s11, %s372
      %p374 = scmp.lt.s32.totalorder %s22, 1
      %s375 = scalar_select %p374, %s22, 1
      %s376 = smul.addr %s375, 8
      %s377 = scalar_lea.vmem %s0, %s376
      %p378 = scmp.lt.s32.totalorder %s22, 1
      %s379 = scalar_select %p378, %s22, 1
      %s380 = smul.addr %s379, 8
      %s381 = scalar_lea.vmem %s11, %s380
      %v382 = vld [vmem:[%s377] sm:$0xff]
      %v383 = vld [vmem:[%s1] sm:$0xff]
      %v384 = vld [vmem:[%s1 + $0x8] sm:$0xff]
      %v385 = vld [vmem:[%s1 + $0x10] sm:$0xff]
      %v386 = vld [vmem:[%s1 + $0x18] sm:$0xff]
      %v387 = vld [vmem:[%s1 + $0x20] sm:$0xff]
      %v388 = vld [vmem:[%s1 + $0x28] sm:$0xff]
      %v389 = vld [vmem:[%s1 + $0x30] sm:$0xff]
      %v390 = vld [vmem:[%s1 + $0x38] sm:$0xff]
      %v391 = vld [vmem:[%s2] sm:$0xff]
      %v392 = vld [vmem:[%s2 + $0x8] sm:$0xff]
      %v393 = vld [vmem:[%s2 + $0x10] sm:$0xff]
      %v394 = vld [vmem:[%s2 + $0x18] sm:$0xff]
      %v395 = vld [vmem:[%s2 + $0x20] sm:$0xff]
      %v396 = vld [vmem:[%s2 + $0x28] sm:$0xff]
      %v397 = vld [vmem:[%s2 + $0x30] sm:$0xff]
      %v398 = vld [vmem:[%s2 + $0x38] sm:$0xff]
      %v399 = vlaneseq
      %v400 = vand.u32 %v399, 127
      %vm401 = vcmp.eq.s32.totalorder %v400, 0
      %402 = vrot.lane.b32.xlu0 %v382, 1
      %v403 = vpop.permute.xlu0 %402
      %v404 = vsel %vm401, %v382, %v403
      %vm405 = vcmp.eq.s32.totalorder %v400, 127
      %406 = vrot.lane.b32.xlu0 %v382, 127
      %v407 = vpop.permute.xlu0 %406
      %v408 = vsel %vm405, %v382, %v407
      %410 = vset.pattern.permute.xlu0 0
      %411 = vperm.xlu0 %410, %v391
      %v412 = vpop.permute.xlu0 %411
      %415 = vset.pattern.permute.xlu0 0
      %416 = vperm.xlu0 %415, %v392
      %v417 = vpop.permute.xlu0 %416
      %420 = vset.pattern.permute.xlu0 0
      %421 = vperm.xlu0 %420, %v393
      %v422 = vpop.permute.xlu0 %421
      %425 = vset.pattern.permute.xlu0 0
      %426 = vperm.xlu0 %425, %v394
      %v427 = vpop.permute.xlu0 %426
      %430 = vset.pattern.permute.xlu0 0
      %431 = vperm.xlu0 %430, %v395
      %v432 = vpop.permute.xlu0 %431
      %435 = vset.pattern.permute.xlu0 0
      %436 = vperm.xlu0 %435, %v396
      %v437 = vpop.permute.xlu0 %436
      %440 = vset.pattern.permute.xlu0 0
      %441 = vperm.xlu0 %440, %v397
      %v442 = vpop.permute.xlu0 %441
      %445 = vset.pattern.permute.xlu0 0
      %446 = vperm.xlu0 %445, %v398
      %v447 = vpop.permute.xlu0 %446
      %vm449 = vcmask 195584
      %v451 = vsel %vm449, %v383, 0
      %v454 = vsel %vm449, %v384, 0
      %v457 = vsel %vm449, %v385, 0
      %v460 = vsel %vm449, %v386, 0
      %v463 = vsel %vm449, %v387, 0
      %v466 = vsel %vm449, %v388, 0
      %v469 = vsel %vm449, %v389, 0
      %v472 = vsel %vm449, %v390, 0
      %474 = vmatprep.subr.mxu0 0.0
      %475 = vmatpush1.msra.mxu0 %v404
      %476 = vmatprep.subr.mxu0 0.0
      %477 = vmatpush1.msra.mxu0 %v382
      %478 = vmatprep.subr.mxu0 0.0
      %479 = vmatpush1.msra.mxu0 %v408
      %480 = vmatprep.subr.mxu0 0.0
      %481 = vmatpush1.msra.mxu0 0.0
      %482 = vmatprep.subr.mxu0 0.0
      %483 = vmatpush1.msra.mxu0 0.0
      %484 = vmatprep.subr.mxu0 0.0
      %485 = vmatpush1.msra.mxu0 0.0
      %486 = vmatprep.subr.mxu0 0.0
      %487 = vmatpush1.msra.mxu0 0.0
      %488 = vmatprep.subr.mxu0 0.0
      %489 = vmatpush1.msra.mxu0 0.0
      %490 = vmatprep.subr.mxu0 0.0
      %491 = vmatpush1.msra.mxu0 0.0
      %492 = vmatprep.subr.mxu0 0.0
      %493 = vmatpush1.msra.mxu0 0.0
      %494 = vmatprep.subr.mxu0 0.0
      %495 = vmatpush1.msra.mxu0 0.0
      %496 = vmatprep.subr.mxu0 0.0
      %497 = vmatpush1.msra.mxu0 0.0
      %498 = vmatprep.subr.mxu0 0.0
      %499 = vmatpush1.msra.mxu0 0.0
      %500 = vmatprep.subr.mxu0 0.0
      %501 = vmatpush1.msra.mxu0 0.0
      %502 = vmatprep.subr.mxu0 0.0
      %503 = vmatpush1.msra.mxu0 0.0
      %504 = vmatprep.subr.mxu0 0.0
      %505 = vmatpush1.msra.mxu0 0.0
      %506 = vmatprep.subr.mxu0 0.0
      %507 = vmatpush1.msra.mxu0 0.0
      %508 = vmatprep.subr.mxu0 0.0
      %509 = vmatpush1.msra.mxu0 0.0
      %510 = vmatprep.subr.mxu0 0.0
      %511 = vmatpush1.msra.mxu0 0.0
      %512 = vmatprep.subr.mxu0 0.0
      %513 = vmatpush1.msra.mxu0 0.0
      %514 = vmatprep.subr.mxu0 0.0
      %515 = vmatpush1.msra.mxu0 0.0
      %516 = vmatprep.subr.mxu0 0.0
      %517 = vmatpush1.msra.mxu0 0.0
      %518 = vmatprep.subr.mxu0 0.0
      %519 = vmatpush1.msra.mxu0 0.0
      %520 = vmatprep.subr.mxu0 0.0
      %521 = vmatpush1.msra.mxu0 0.0
      %522 = vmatprep.subr.mxu0 0.0
      %523 = vmatpush1.msra.mxu0 0.0
      %524 = vmatprep.subr.mxu0 0.0
      %525 = vmatpush1.msra.mxu0 0.0
      %526 = vmatprep.subr.mxu0 0.0
      %527 = vmatpush1.msra.mxu0 0.0
      %528 = vmatprep.subr.mxu0 0.0
      %529 = vmatpush1.msra.mxu0 0.0
      %530 = vmatprep.subr.mxu0 0.0
      %531 = vmatpush1.msra.mxu0 0.0
      %532 = vmatprep.subr.mxu0 0.0
      %533 = vmatpush1.msra.mxu0 0.0
      %534 = vmatprep.subr.mxu0 0.0
      %535 = vmatpush1.msra.mxu0 0.0
      %536 = vmatprep.subr.mxu0 0.0
      %537 = vmatpush1.msra.mxu0 0.0
      %538 = vmatprep.mubr.f32.mxu0 0.0
      %539 = vmatmul.mubr.f32.gmra.mrb[0].mxu0 %v451
      %v540 = vpop.f32.mrb[0].mxu0
      %v541 = vadd.f32 %v412, %v540
      %v542 = vpop.f32.mrb[0].mxu0
      %543 = vmatprep.mubr.f32.mxu0 0.0
      %544 = vmatmul.mubr.f32.gmra.mrb[0].mxu0 %v454
      %v545 = vpop.f32.mrb[0].mxu0
      %v546 = vadd.f32 %v417, %v545
      %v547 = vpop.f32.mrb[0].mxu0
      %548 = vmatprep.mubr.f32.mxu0 0.0
      %549 = vmatmul.mubr.f32.gmra.mrb[0].mxu0 %v457
      %v550 = vpop.f32.mrb[0].mxu0
      %v551 = vadd.f32 %v422, %v550
      %v552 = vpop.f32.mrb[0].mxu0
      %553 = vmatprep.mubr.f32.mxu0 0.0
      %554 = vmatmul.mubr.f32.gmra.mrb[0].mxu0 %v460
      %v555 = vpop.f32.mrb[0].mxu0
      %v556 = vadd.f32 %v427, %v555
      %v557 = vpop.f32.mrb[0].mxu0
      %558 = vmatprep.mubr.f32.mxu0 0.0
      %559 = vmatmul.mubr.f32.gmra.mrb[0].mxu0 %v463
      %v560 = vpop.f32.mrb[0].mxu0
      %v561 = vadd.f32 %v432, %v560
      %v562 = vpop.f32.mrb[0].mxu0
      %563 = vmatprep.mubr.f32.mxu0 0.0
      %564 = vmatmul.mubr.f32.gmra.mrb[0].mxu0 %v466
      %v565 = vpop.f32.mrb[0].mxu0
      %v566 = vadd.f32 %v437, %v565
      %v567 = vpop.f32.mrb[0].mxu0
      %568 = vmatprep.mubr.f32.mxu0 0.0
      %569 = vmatmul.mubr.f32.gmra.mrb[0].mxu0 %v469
      %v570 = vpop.f32.mrb[0].mxu0
      %v571 = vadd.f32 %v442, %v570
      %v572 = vpop.f32.mrb[0].mxu0
      %573 = vmatprep.mubr.f32.mxu0 0.0
      %574 = vmatmul.mubr.f32.gmra.mrb[0].mxu0 %v472
      %v575 = vpop.f32.mrb[0].mxu0
      %v576 = vadd.f32 %v447, %v575
      %v577 = vpop.f32.mrb[0].mxu0
      %578 = vdwg.mxu0
      %v579 = vmax.f32 %v541, 0.0
      %v580 = vmax.f32 %v546, 0.0
      %v581 = vmax.f32 %v551, 0.0
      %v582 = vmax.f32 %v556, 0.0
      %v583 = vmax.f32 %v561, 0.0
      %v584 = vmax.f32 %v566, 0.0
      %v585 = vmax.f32 %v571, 0.0
      %v586 = vmax.f32 %v576, 0.0
      %v587 = vld [vmem:[%s3] sm:$0xff]
      %v588 = vld [vmem:[%s3 + $0x8] sm:$0xff]
      %v589 = vld [vmem:[%s3 + $0x10] sm:$0xff]
      %v590 = vld [vmem:[%s3 + $0x18] sm:$0xff]
      %v591 = vld [vmem:[%s3 + $0x20] sm:$0xff]
      %v592 = vld [vmem:[%s3 + $0x28] sm:$0xff]
      %v593 = vld [vmem:[%s3 + $0x30] sm:$0xff]
      %v594 = vld [vmem:[%s3 + $0x38] sm:$0xff]
      %v595 = vld [vmem:[%s4] sm:$0xff]
      %v596 = vld [vmem:[%s4 + $0x8] sm:$0xff]
      %v597 = vld [vmem:[%s4 + $0x10] sm:$0xff]
      %v598 = vld [vmem:[%s4 + $0x18] sm:$0xff]
      %599 = vrot.lane.b32.xlu0 %v579, 1
      %v600 = vpop.permute.xlu0 %599
      %601 = vrot.lane.b32.xlu0 %v580, 1
      %v602 = vpop.permute.xlu0 %601
      %603 = vrot.lane.b32.xlu0 %v581, 1
      %v604 = vpop.permute.xlu0 %603
      %605 = vrot.lane.b32.xlu0 %v582, 1
      %v606 = vpop.permute.xlu0 %605
      %607 = vrot.lane.b32.xlu0 %v583, 1
      %v608 = vpop.permute.xlu0 %607
      %609 = vrot.lane.b32.xlu0 %v584, 1
      %v610 = vpop.permute.xlu0 %609
      %611 = vrot.lane.b32.xlu0 %v585, 1
      %v612 = vpop.permute.xlu0 %611
      %613 = vrot.lane.b32.xlu0 %v586, 1
      %v614 = vpop.permute.xlu0 %613
      %v615 = vsel %vm401, %v579, %v600
      %v616 = vsel %vm401, %v580, %v602
      %v617 = vsel %vm401, %v581, %v604
      %v618 = vsel %vm401, %v582, %v606
      %v619 = vsel %vm401, %v583, %v608
      %v620 = vsel %vm401, %v584, %v610
      %v621 = vsel %vm401, %v585, %v612
      %v622 = vsel %vm401, %v586, %v614
      %623 = vrot.lane.b32.xlu0 %v579, 127
      %v624 = vpop.permute.xlu0 %623
      %625 = vrot.lane.b32.xlu0 %v580, 127
      %v626 = vpop.permute.xlu0 %625
      %627 = vrot.lane.b32.xlu0 %v581, 127
      %v628 = vpop.permute.xlu0 %627
      %629 = vrot.lane.b32.xlu0 %v582, 127
      %v630 = vpop.permute.xlu0 %629
      %631 = vrot.lane.b32.xlu0 %v583, 127
      %v632 = vpop.permute.xlu0 %631
      %633 = vrot.lane.b32.xlu0 %v584, 127
      %v634 = vpop.permute.xlu0 %633
      %635 = vrot.lane.b32.xlu0 %v585, 127
      %v636 = vpop.permute.xlu0 %635
      %637 = vrot.lane.b32.xlu0 %v586, 127
      %v638 = vpop.permute.xlu0 %637
      %v639 = vsel %vm405, %v579, %v624
      %v640 = vsel %vm405, %v580, %v626
      %v641 = vsel %vm405, %v581, %v628
      %v642 = vsel %vm405, %v582, %v630
      %v643 = vsel %vm405, %v583, %v632
      %v644 = vsel %vm405, %v584, %v634
      %v645 = vsel %vm405, %v585, %v636
      %v646 = vsel %vm405, %v586, %v638
      %648 = vset.pattern.permute.xlu0 0
      %649 = vperm.xlu0 %648, %v595
      %v650 = vpop.permute.xlu0 %649
      %653 = vset.pattern.permute.xlu0 0
      %654 = vperm.xlu0 %653, %v596
      %v655 = vpop.permute.xlu0 %654
      %658 = vset.pattern.permute.xlu0 0
      %659 = vperm.xlu0 %658, %v597
      %v660 = vpop.permute.xlu0 %659
      %663 = vset.pattern.permute.xlu0 0
      %664 = vperm.xlu0 %663, %v598
      %v665 = vpop.permute.xlu0 %664
      %vm667 = vcmask 523264
      %v669 = vsel %vm667, %v588, 0
      %v672 = vsel %vm667, %v590, 0
      %v675 = vsel %vm667, %v592, 0
      %v678 = vsel %vm667, %v594, 0
      %680 = vmatprep.subr.mxu0 0.0
      %681 = vmatpush1.msra.mxu0 %v615
      %682 = vmatprep.subr.mxu0 0.0
      %683 = vmatpush1.msra.mxu0 %v616
      %684 = vmatprep.subr.mxu0 0.0
      %685 = vmatpush1.msra.mxu0 %v617
      %686 = vmatprep.subr.mxu0 0.0
      %687 = vmatpush1.msra.mxu0 %v618
      %688 = vmatprep.subr.mxu0 0.0
      %689 = vmatpush1.msra.mxu0 %v619
      %690 = vmatprep.subr.mxu0 0.0
      %691 = vmatpush1.msra.mxu0 %v620
      %692 = vmatprep.subr.mxu0 0.0
      %693 = vmatpush1.msra.mxu0 %v621
      %694 = vmatprep.subr.mxu0 0.0
      %695 = vmatpush1.msra.mxu0 %v622
      %696 = vmatprep.subr.mxu0 0.0
      %697 = vmatpush1.msra.mxu0 %v579
      %698 = vmatprep.subr.mxu0 0.0
      %699 = vmatpush1.msra.mxu0 %v580
      %700 = vmatprep.subr.mxu0 0.0
      %701 = vmatpush1.msra.mxu0 %v581
      %702 = vmatprep.subr.mxu0 0.0
      %703 = vmatpush1.msra.mxu0 %v582
      %704 = vmatprep.subr.mxu0 0.0
      %705 = vmatpush1.msra.mxu0 %v583
      %706 = vmatprep.subr.mxu0 0.0
      %707 = vmatpush1.msra.mxu0 %v584
      %708 = vmatprep.subr.mxu0 0.0
      %709 = vmatpush1.msra.mxu0 %v585
      %710 = vmatprep.subr.mxu0 0.0
      %711 = vmatpush1.msra.mxu0 %v586
      %712 = vmatprep.subr.mxu0 0.0
      %713 = vmatpush1.msra.mxu0 %v639
      %714 = vmatprep.subr.mxu0 0.0
      %715 = vmatpush1.msra.mxu0 %v640
      %716 = vmatprep.subr.mxu0 0.0
      %717 = vmatpush1.msra.mxu0 %v641
      %718 = vmatprep.subr.mxu0 0.0
      %719 = vmatpush1.msra.mxu0 %v642
      %720 = vmatprep.subr.mxu0 0.0
      %721 = vmatpush1.msra.mxu0 %v643
      %722 = vmatprep.subr.mxu0 0.0
      %723 = vmatpush1.msra.mxu0 %v644
      %724 = vmatprep.subr.mxu0 0.0
      %725 = vmatpush1.msra.mxu0 %v645
      %726 = vmatprep.subr.mxu0 0.0
      %727 = vmatpush1.msra.mxu0 %v646
      %728 = vmatprep.subr.mxu0 0.0
      %729 = vmatpush1.msra.mxu0 0.0
      %730 = vmatprep.subr.mxu0 0.0
      %731 = vmatpush1.msra.mxu0 0.0
      %732 = vmatprep.subr.mxu0 0.0
      %733 = vmatpush1.msra.mxu0 0.0
      %734 = vmatprep.subr.mxu0 0.0
      %735 = vmatpush1.msra.mxu0 0.0
      %736 = vmatprep.subr.mxu0 0.0
      %737 = vmatpush1.msra.mxu0 0.0
      %738 = vmatprep.subr.mxu0 0.0
      %739 = vmatpush1.msra.mxu0 0.0
      %740 = vmatprep.subr.mxu0 0.0
      %741 = vmatpush1.msra.mxu0 0.0
      %742 = vmatprep.subr.mxu0 0.0
      %743 = vmatpush1.msra.mxu0 0.0
      %744 = vmatprep.mubr.f32.mxu0 %v669
      %745 = vmatmul.mubr.f32.gmra.mrb[0].mxu0 %v587
      %v746 = vpop.f32.mrb[0].mxu0
      %v747 = vadd.f32 %v650, %v746
      %v748 = vpop.f32.mrb[0].mxu0
      %749 = vmatprep.mubr.f32.mxu0 %v672
      %750 = vmatmul.mubr.f32.gmra.mrb[0].mxu0 %v589
      %v751 = vpop.f32.mrb[0].mxu0
      %v752 = vadd.f32 %v655, %v751
      %v753 = vpop.f32.mrb[0].mxu0
      %754 = vmatprep.mubr.f32.mxu0 %v675
      %755 = vmatmul.mubr.f32.gmra.mrb[0].mxu0 %v591
      %v756 = vpop.f32.mrb[0].mxu0
      %v757 = vadd.f32 %v660, %v756
      %v758 = vpop.f32.mrb[0].mxu0
      %759 = vmatprep.mubr.f32.mxu0 %v678
      %760 = vmatmul.mubr.f32.gmra.mrb[0].mxu0 %v593
      %v761 = vpop.f32.mrb[0].mxu0
      %v762 = vadd.f32 %v665, %v761
      %v763 = vpop.f32.mrb[0].mxu0
      %764 = vdwg.mxu0
      %v765 = vmax.f32 %v747, 0.0
      %v766 = vmax.f32 %v752, 0.0
      %v767 = vmax.f32 %v757, 0.0
      %v768 = vmax.f32 %v762, 0.0
      %v769 = vld [vmem:[%s5] sm:$0xff]
      %v770 = vld [vmem:[%s5 + $0x8] sm:$0xff]
      %v771 = vld [vmem:[%s6] sm:$0xff]
      %v772 = vld [vmem:[%s6 + $0x8] sm:$0xff]
      %773 = vrot.lane.b32.xlu0 %v765, 1
      %v774 = vpop.permute.xlu0 %773
      %775 = vrot.lane.b32.xlu0 %v766, 1
      %v776 = vpop.permute.xlu0 %775
      %777 = vrot.lane.b32.xlu0 %v767, 1
      %v778 = vpop.permute.xlu0 %777
      %779 = vrot.lane.b32.xlu0 %v768, 1
      %v780 = vpop.permute.xlu0 %779
      %v781 = vsel %vm401, %v765, %v774
      %v782 = vsel %vm401, %v766, %v776
      %v783 = vsel %vm401, %v767, %v778
      %v784 = vsel %vm401, %v768, %v780
      %785 = vrot.lane.b32.xlu0 %v765, 127
      %v786 = vpop.permute.xlu0 %785
      %787 = vrot.lane.b32.xlu0 %v766, 127
      %v788 = vpop.permute.xlu0 %787
      %789 = vrot.lane.b32.xlu0 %v767, 127
      %v790 = vpop.permute.xlu0 %789
      %791 = vrot.lane.b32.xlu0 %v768, 127
      %v792 = vpop.permute.xlu0 %791
      %v793 = vsel %vm405, %v765, %v786
      %v794 = vsel %vm405, %v766, %v788
      %v795 = vsel %vm405, %v767, %v790
      %v796 = vsel %vm405, %v768, %v792
      %798 = vset.pattern.permute.xlu0 0
      %799 = vperm.xlu0 %798, %v771
      %v800 = vpop.permute.xlu0 %799
      %803 = vset.pattern.permute.xlu0 0
      %804 = vperm.xlu0 %803, %v772
      %v805 = vpop.permute.xlu0 %804
      %vm807 = vcmask 785408
      %v809 = vsel %vm807, %v769, 0
      %v812 = vsel %vm807, %v770, 0
      %814 = vmatprep.subr.mxu0 0.0
      %815 = vmatpush1.msra.mxu0 %v781
      %816 = vmatprep.subr.mxu0 0.0
      %817 = vmatpush1.msra.mxu0 %v782
      %818 = vmatprep.subr.mxu0 0.0
      %819 = vmatpush1.msra.mxu0 %v783
      %820 = vmatprep.subr.mxu0 0.0
      %821 = vmatpush1.msra.mxu0 %v784
      %822 = vmatprep.subr.mxu0 0.0
      %823 = vmatpush1.msra.mxu0 %v765
      %824 = vmatprep.subr.mxu0 0.0
      %825 = vmatpush1.msra.mxu0 %v766
      %826 = vmatprep.subr.mxu0 0.0
      %827 = vmatpush1.msra.mxu0 %v767
      %828 = vmatprep.subr.mxu0 0.0
      %829 = vmatpush1.msra.mxu0 %v768
      %830 = vmatprep.subr.mxu0 0.0
      %831 = vmatpush1.msra.mxu0 %v793
      %832 = vmatprep.subr.mxu0 0.0
      %833 = vmatpush1.msra.mxu0 %v794
      %834 = vmatprep.subr.mxu0 0.0
      %835 = vmatpush1.msra.mxu0 %v795
      %836 = vmatprep.subr.mxu0 0.0
      %837 = vmatpush1.msra.mxu0 %v796
      %838 = vmatprep.subr.mxu0 0.0
      %839 = vmatpush1.msra.mxu0 0.0
      %840 = vmatprep.subr.mxu0 0.0
      %841 = vmatpush1.msra.mxu0 0.0
      %842 = vmatprep.subr.mxu0 0.0
      %843 = vmatpush1.msra.mxu0 0.0
      %844 = vmatprep.subr.mxu0 0.0
      %845 = vmatpush1.msra.mxu0 0.0
      %846 = vmatprep.subr.mxu0 0.0
      %847 = vmatpush1.msra.mxu0 0.0
      %848 = vmatprep.subr.mxu0 0.0
      %849 = vmatpush1.msra.mxu0 0.0
      %850 = vmatprep.subr.mxu0 0.0
      %851 = vmatpush1.msra.mxu0 0.0
      %852 = vmatprep.subr.mxu0 0.0
      %853 = vmatpush1.msra.mxu0 0.0
      %854 = vmatprep.subr.mxu0 0.0
      %855 = vmatpush1.msra.mxu0 0.0
      %856 = vmatprep.subr.mxu0 0.0
      %857 = vmatpush1.msra.mxu0 0.0
      %858 = vmatprep.subr.mxu0 0.0
      %859 = vmatpush1.msra.mxu0 0.0
      %860 = vmatprep.subr.mxu0 0.0
      %861 = vmatpush1.msra.mxu0 0.0
      %862 = vmatprep.subr.mxu0 0.0
      %863 = vmatpush1.msra.mxu0 0.0
      %864 = vmatprep.subr.mxu0 0.0
      %865 = vmatpush1.msra.mxu0 0.0
      %866 = vmatprep.subr.mxu0 0.0
      %867 = vmatpush1.msra.mxu0 0.0
      %868 = vmatprep.subr.mxu0 0.0
      %869 = vmatpush1.msra.mxu0 0.0
      %870 = vmatprep.subr.mxu0 0.0
      %871 = vmatpush1.msra.mxu0 0.0
      %872 = vmatprep.subr.mxu0 0.0
      %873 = vmatpush1.msra.mxu0 0.0
      %874 = vmatprep.subr.mxu0 0.0
      %875 = vmatpush1.msra.mxu0 0.0
      %876 = vmatprep.subr.mxu0 0.0
      %877 = vmatpush1.msra.mxu0 0.0
      %878 = vmatprep.mubr.f32.mxu0 0.0
      %879 = vmatmul.mubr.f32.gmra.mrb[0].mxu0 %v809
      %v880 = vpop.f32.mrb[0].mxu0
      %v881 = vadd.f32 %v800, %v880
      %v882 = vpop.f32.mrb[0].mxu0
      %883 = vmatprep.mubr.f32.mxu0 0.0
      %884 = vmatmul.mubr.f32.gmra.mrb[0].mxu0 %v812
      %v885 = vpop.f32.mrb[0].mxu0
      %v886 = vadd.f32 %v805, %v885
      %v887 = vpop.f32.mrb[0].mxu0
      %888 = vdwg.mxu0
      %v889 = vmax.f32 %v881, 0.0
      %v890 = vmax.f32 %v886, 0.0
      %v891 = vld [vmem:[%s7] sm:$0xff]
      %v892 = vld [vmem:[%s8] sm:$0xff]
      %893 = vrot.lane.b32.xlu0 %v889, 1
      %v894 = vpop.permute.xlu0 %893
      %895 = vrot.lane.b32.xlu0 %v890, 1
      %v896 = vpop.permute.xlu0 %895
      %v897 = vsel %vm401, %v889, %v894
      %v898 = vsel %vm401, %v890, %v896
      %899 = vrot.lane.b32.xlu0 %v889, 127
      %v900 = vpop.permute.xlu0 %899
      %901 = vrot.lane.b32.xlu0 %v890, 127
      %v902 = vpop.permute.xlu0 %901
      %v903 = vsel %vm405, %v889, %v900
      %v904 = vsel %vm405, %v890, %v902
      %906 = vset.pattern.permute.xlu0 0
      %907 = vperm.xlu0 %906, %v892
      %v908 = vpop.permute.xlu0 %907
      %vm910 = vcmask 392192
      %v912 = vsel %vm910, %v891, 0
      %914 = vmatprep.subr.mxu0 0.0
      %915 = vmatpush1.msra.mxu0 %v897
      %916 = vmatprep.subr.mxu0 0.0
      %917 = vmatpush1.msra.mxu0 %v898
      %918 = vmatprep.subr.mxu0 0.0
      %919 = vmatpush1.msra.mxu0 %v889
      %920 = vmatprep.subr.mxu0 0.0
      %921 = vmatpush1.msra.mxu0 %v890
      %922 = vmatprep.subr.mxu0 0.0
      %923 = vmatpush1.msra.mxu0 %v903
      %924 = vmatprep.subr.mxu0 0.0
      %925 = vmatpush1.msra.mxu0 %v904
      %926 = vmatprep.subr.mxu0 0.0
      %927 = vmatpush1.msra.mxu0 0.0
      %928 = vmatprep.subr.mxu0 0.0
      %929 = vmatpush1.msra.mxu0 0.0
      %930 = vmatprep.subr.mxu0 0.0
      %931 = vmatpush1.msra.mxu0 0.0
      %932 = vmatprep.subr.mxu0 0.0
      %933 = vmatpush1.msra.mxu0 0.0
      %934 = vmatprep.subr.mxu0 0.0
      %935 = vmatpush1.msra.mxu0 0.0
      %936 = vmatprep.subr.mxu0 0.0
      %937 = vmatpush1.msra.mxu0 0.0
      %938 = vmatprep.subr.mxu0 0.0
      %939 = vmatpush1.msra.mxu0 0.0
      %940 = vmatprep.subr.mxu0 0.0
      %941 = vmatpush1.msra.mxu0 0.0
      %942 = vmatprep.subr.mxu0 0.0
      %943 = vmatpush1.msra.mxu0 0.0
      %944 = vmatprep.subr.mxu0 0.0
      %945 = vmatpush1.msra.mxu0 0.0
      %946 = vmatprep.subr.mxu0 0.0
      %947 = vmatpush1.msra.mxu0 0.0
      %948 = vmatprep.subr.mxu0 0.0
      %949 = vmatpush1.msra.mxu0 0.0
      %950 = vmatprep.subr.mxu0 0.0
      %951 = vmatpush1.msra.mxu0 0.0
      %952 = vmatprep.subr.mxu0 0.0
      %953 = vmatpush1.msra.mxu0 0.0
      %954 = vmatprep.subr.mxu0 0.0
      %955 = vmatpush1.msra.mxu0 0.0
      %956 = vmatprep.subr.mxu0 0.0
      %957 = vmatpush1.msra.mxu0 0.0
      %958 = vmatprep.subr.mxu0 0.0
      %959 = vmatpush1.msra.mxu0 0.0
      %960 = vmatprep.subr.mxu0 0.0
      %961 = vmatpush1.msra.mxu0 0.0
      %962 = vmatprep.subr.mxu0 0.0
      %963 = vmatpush1.msra.mxu0 0.0
      %964 = vmatprep.subr.mxu0 0.0
      %965 = vmatpush1.msra.mxu0 0.0
      %966 = vmatprep.subr.mxu0 0.0
      %967 = vmatpush1.msra.mxu0 0.0
      %968 = vmatprep.subr.mxu0 0.0
      %969 = vmatpush1.msra.mxu0 0.0
      %970 = vmatprep.subr.mxu0 0.0
      %971 = vmatpush1.msra.mxu0 0.0
      %972 = vmatprep.subr.mxu0 0.0
      %973 = vmatpush1.msra.mxu0 0.0
      %974 = vmatprep.subr.mxu0 0.0
      %975 = vmatpush1.msra.mxu0 0.0
      %976 = vmatprep.subr.mxu0 0.0
      %977 = vmatpush1.msra.mxu0 0.0
      %978 = vmatprep.mubr.f32.mxu0 0.0
      %979 = vmatmul.mubr.f32.gmra.mrb[0].mxu0 %v912
      %v980 = vpop.f32.mrb[0].mxu0
      %v981 = vadd.f32 %v908, %v980
      %v982 = vpop.f32.mrb[0].mxu0
      %983 = vdwg.mxu0
      %v984 = vmax.f32 %v981, 0.0
      %v985 = vld [vmem:[%s9] sm:$0xff]
      %v986 = vld [vmem:[%s10] sm:$0xff]
      %987 = vrot.lane.b32.xlu0 %v984, 1
      %v988 = vpop.permute.xlu0 %987
      %v989 = vsel %vm401, %v984, %v988
      %990 = vrot.lane.b32.xlu0 %v984, 127
      %v991 = vpop.permute.xlu0 %990
      %v992 = vsel %vm405, %v984, %v991
      %994 = vset.pattern.permute.xlu0 0
      %995 = vperm.xlu0 %994, %v986
      %v996 = vpop.permute.xlu0 %995
      %v999 = vsel %vm449, %v985, 0
      %1001 = vmatprep.subr.mxu0 0.0
      %1002 = vmatpush1.msra.mxu0 %v989
      %1003 = vmatprep.subr.mxu0 0.0
      %1004 = vmatpush1.msra.mxu0 %v984
      %1005 = vmatprep.subr.mxu0 0.0
      %1006 = vmatpush1.msra.mxu0 %v992
      %1007 = vmatprep.subr.mxu0 0.0
      %1008 = vmatpush1.msra.mxu0 0.0
      %1009 = vmatprep.subr.mxu0 0.0
      %1010 = vmatpush1.msra.mxu0 0.0
      %1011 = vmatprep.subr.mxu0 0.0
      %1012 = vmatpush1.msra.mxu0 0.0
      %1013 = vmatprep.subr.mxu0 0.0
      %1014 = vmatpush1.msra.mxu0 0.0
      %1015 = vmatprep.subr.mxu0 0.0
      %1016 = vmatpush1.msra.mxu0 0.0
      %1017 = vmatprep.subr.mxu0 0.0
      %1018 = vmatpush1.msra.mxu0 0.0
      %1019 = vmatprep.subr.mxu0 0.0
      %1020 = vmatpush1.msra.mxu0 0.0
      %1021 = vmatprep.subr.mxu0 0.0
      %1022 = vmatpush1.msra.mxu0 0.0
      %1023 = vmatprep.subr.mxu0 0.0
      %1024 = vmatpush1.msra.mxu0 0.0
      %1025 = vmatprep.subr.mxu0 0.0
      %1026 = vmatpush1.msra.mxu0 0.0
      %1027 = vmatprep.subr.mxu0 0.0
      %1028 = vmatpush1.msra.mxu0 0.0
      %1029 = vmatprep.subr.mxu0 0.0
      %1030 = vmatpush1.msra.mxu0 0.0
      %1031 = vmatprep.subr.mxu0 0.0
      %1032 = vmatpush1.msra.mxu0 0.0
      %1033 = vmatprep.subr.mxu0 0.0
      %1034 = vmatpush1.msra.mxu0 0.0
      %1035 = vmatprep.subr.mxu0 0.0
      %1036 = vmatpush1.msra.mxu0 0.0
      %1037 = vmatprep.subr.mxu0 0.0
      %1038 = vmatpush1.msra.mxu0 0.0
      %1039 = vmatprep.subr.mxu0 0.0
      %1040 = vmatpush1.msra.mxu0 0.0
      %1041 = vmatprep.subr.mxu0 0.0
      %1042 = vmatpush1.msra.mxu0 0.0
      %1043 = vmatprep.subr.mxu0 0.0
      %1044 = vmatpush1.msra.mxu0 0.0
      %1045 = vmatprep.subr.mxu0 0.0
      %1046 = vmatpush1.msra.mxu0 0.0
      %1047 = vmatprep.subr.mxu0 0.0
      %1048 = vmatpush1.msra.mxu0 0.0
      %1049 = vmatprep.subr.mxu0 0.0
      %1050 = vmatpush1.msra.mxu0 0.0
      %1051 = vmatprep.subr.mxu0 0.0
      %1052 = vmatpush1.msra.mxu0 0.0
      %1053 = vmatprep.subr.mxu0 0.0
      %1054 = vmatpush1.msra.mxu0 0.0
      %1055 = vmatprep.subr.mxu0 0.0
      %1056 = vmatpush1.msra.mxu0 0.0
      %1057 = vmatprep.subr.mxu0 0.0
      %1058 = vmatpush1.msra.mxu0 0.0
      %1059 = vmatprep.subr.mxu0 0.0
      %1060 = vmatpush1.msra.mxu0 0.0
      %1061 = vmatprep.subr.mxu0 0.0
      %1062 = vmatpush1.msra.mxu0 0.0
      %1063 = vmatprep.subr.mxu0 0.0
      %1064 = vmatpush1.msra.mxu0 0.0
      %1065 = vmatprep.mubr.f32.mxu0 0.0
      %1066 = vmatmul.mubr.f32.gmra.mrb[0].mxu0 %v999
      %v1067 = vpop.f32.mrb[0].mxu0
      %v1068 = vadd.f32 %v996, %v1067
      %v1069 = vpop.f32.mrb[0].mxu0
      %1070 = vdwg.mxu0
      %v1071 = vmax.f32 %v1068, 0.0
      %1072 = vst [vmem:[%s381] sm:$0xff] %v1071
      %p1073 = scmp.lt.s32.totalorder %s22, 1
      %s1074 = scalar_select %p1073, %s22, 1
      %s1075 = smul.addr %s1074, 8
      %s1076 = scalar_lea.vmem %s11, %s1075
      // Predicated region
      $region65: #{n_vcnn_forward.1} parent=63 // pred_check
        %p1077 = pneg %p276
      $region66: #{n_vcnn_forward.1} parent=63 // pred_check_branch
        %1079 = sbr.rel (%p1077) target = $region68
      $region67: #{n_vcnn_forward.1} parent=63 // pred_region
        _
      $region68: #{n_vcnn_forward.1} parent=63 // pred_fallthru
        _
    $region64: #{n_vcnn_forward.1} parent=5 // pred_fallthru
      _
    %p1080 = scmp.le.s32.totalorder 2, %s17
    // Predicated region
    $region69: #{n_vcnn_forward.1} parent=5 // pred_check
      %p1081 = pneg %p1080
    $region70: #{n_vcnn_forward.1} parent=5 // pred_check_branch
      %1083 = sbr.rel (%p1081) target = $region72
    $region71: #{n_vcnn_forward.1} parent=5 // pred_region
      %s1084 = ssub.s32 %s17, 2
      // Predicated region
      $region73: #{n_vcnn_forward.1} parent=71 // pred_check
        %p1085 = pneg %p282
      $region74: #{n_vcnn_forward.1} parent=71 // pred_check_branch
        %1087 = sbr.rel (%p1085) target = $region76
      $region75: #{n_vcnn_forward.1} parent=71 // pred_region
        %p1088 = scmp.lt.s32.totalorder %s23, 1
        %s1089 = scalar_select %p1088, %s23, 1
        %s1090 = smul.addr %s1089, 8
        %s1091 = scalar_lea.vmem %s11, %s1090
      $region76: #{n_vcnn_forward.1} parent=71 // pred_fallthru
        _
    $region72: #{n_vcnn_forward.1} parent=5 // pred_fallthru
      _
  $region6: #{n_vcnn_forward.1} parent=0 // loop_footer
    %s21 = sadd.s32 1, %s17
  $region7: #{n_vcnn_forward.1} parent=0 // loop_footer_branch
    %16 = sbr.rel target = $region3
  $region8: #{n_vcnn_forward.1} parent=0 // loop_exit
    _

</llo_original>
